<compile_context>
chip_gen: v7x
topology: tpu7x:2x2x1
jax: 0.10.0
libtpu: 0.0.40
codegen_flags: <defaults>
</compile_context>

<pallas_src>
import functools

import jax
import jax.numpy as jnp
from jax.experimental import pallas as pl
from jax.experimental.pallas import tpu as pltpu


def _round_up(x, m):
    return (x + m - 1) // m * m


def _two_layer_net_kernel(x_ref, w1_ref, b1_ref, w2_ref, b2_ref, out_ref):
    # Linear1 + ReLU (clamp(min=0)): native-dtype operands on the MXU, f32 acc.
    h = jnp.dot(x_ref[...], w1_ref[...],
                preferred_element_type=jnp.float32) + b1_ref[...]        # [n, H]
    h = jnp.maximum(h, 0.0)

    # Linear2. Cast the activation back to the weight dtype so bf16 weights stay
    # bf16 on the MXU (no-op for f32; on v5e this only saves weight-DMA bytes).
    logits = jnp.dot(h.astype(w2_ref.dtype), w2_ref[...],
                     preferred_element_type=jnp.float32) + b2_ref[...]   # [n, D_out]

    # Softmax over the true class dim (no lane padding -> no masking needed).
    m = jnp.max(logits, axis=-1, keepdims=True)
    e = jnp.exp(logits - m)
    denom = jnp.sum(e, axis=-1, keepdims=True)
    out_ref[...] = (e / denom).astype(out_ref.dtype)   # exact division


@functools.partial(jax.jit, static_argnames=("tile_n",))
def two_layer_net(x, w1, b1, w2, b2, *, tile_n=512):
    """x: [N, D_in]; w1: [D_in, H]; b1: [H]; w2: [H, D_out]; b2: [D_out]."""
    N, D_in = x.shape
    H = w1.shape[1]
    D_out = w2.shape[1]
    b1r = b1.reshape(1, H)
    b2r = b2.reshape(1, D_out)

    if N <= tile_n:
        # --- single-shot path: no grid, no pipeline, everything resident in VMEM ---
        Np = _round_up(N, 8)  # sublane alignment only
        xp = x if Np == N else jnp.pad(x, ((0, Np - N), (0, 0)))
        vmem = pl.BlockSpec(memory_space=pltpu.MemorySpace.VMEM)
        out = pl.pallas_call(
            _two_layer_net_kernel,
            out_shape=jax.ShapeDtypeStruct((Np, D_out), jnp.float32),
            in_specs=[vmem] * 5,
            out_specs=vmem,
        )(xp, w1, b1r, w2, b2r)
        return out if Np == N else out[:N]

    # --- tiled path: stream x/out over the batch axis; weights/biases VMEM-resident ---
    Np = _round_up(N, tile_n)   # with the default tile_n, callers should pick N | tile_n
    xp = x if Np == N else jnp.pad(x, ((0, Np - N), (0, 0)))
    grid = (Np // tile_n,)

    cost = pl.CostEstimate(
        flops=2 * Np * (D_in * H + H * D_out),
        transcendentals=Np * D_out,
        bytes_accessed=4 * (Np * (D_in + D_out) + D_in * H + H + H * D_out + D_out),
    )

    out = pl.pallas_call(
        _two_layer_net_kernel,
        out_shape=jax.ShapeDtypeStruct((Np, D_out), jnp.float32),
        grid=grid,
        in_specs=[
            pl.BlockSpec((tile_n, D_in), lambda i: (i, 0)),
            pl.BlockSpec((D_in, H), lambda i: (0, 0)),
            pl.BlockSpec((1, H), lambda i: (0, 0)),
            pl.BlockSpec((H, D_out), lambda i: (0, 0)),
            pl.BlockSpec((1, D_out), lambda i: (0, 0)),
        ],
        out_specs=pl.BlockSpec((tile_n, D_out), lambda i: (i, 0)),
        compiler_params=pltpu.CompilerParams(
            dimension_semantics=("parallel",)),
        cost_estimate=cost,
    )(xp, w1, b1r, w2, b2r)
    return out if Np == N else out[:N]


def _reference(x, w1, b1, w2, b2):
    h = jnp.maximum(jnp.dot(x, w1, precision=jax.lax.Precision.HIGHEST) + b1, 0.0)
    logits = jnp.dot(h, w2, precision=jax.lax.Precision.HIGHEST) + b2
    return jax.nn.softmax(logits, axis=1)


if __name__ == "__main__":
    # Shapes consistent with the module: TwoLayerNet(D_in=32, H=64, D_out=16)
    D_in, H, D_out = 32, 64, 16

    key = jax.random.PRNGKey(0)
    kx, kw1, kb1, kw2, kb2, kx2 = jax.random.split(key, 6)

    # Deterministic param init (mimicking nn.Linear's uniform(-1/sqrt(fan_in), +))
    lim1 = 1.0 / jnp.sqrt(jnp.float32(D_in))
    lim2 = 1.0 / jnp.sqrt(jnp.float32(H))
    w1 = jax.random.uniform(kw1, (D_in, H), minval=-lim1, maxval=lim1, dtype=jnp.float32)
    b1 = jax.random.uniform(kb1, (H,), minval=-lim1, maxval=lim1, dtype=jnp.float32)
    w2 = jax.random.uniform(kw2, (H, D_out), minval=-lim2, maxval=lim2, dtype=jnp.float32)
    b2 = jax.random.uniform(kb2, (D_out,), minval=-lim2, maxval=lim2, dtype=jnp.float32)

    # 1) Small batch -> single-shot (no-grid, all-VMEM) path.
    N_small = 8
    x_small = jax.random.normal(kx, (N_small, D_in), dtype=jnp.float32)
    out_small = jax.block_until_ready(two_layer_net(x_small, w1, b1, w2, b2))
    ref_small = _reference(x_small, w1, b1, w2, b2)
    assert out_small.shape == (N_small, D_out)
    assert jnp.allclose(out_small, ref_small, atol=1e-4, rtol=1e-4), "mismatch vs reference (small)"
    assert jnp.allclose(jnp.sum(out_small, axis=1), 1.0, atol=1e-5), "softmax rows must sum to ~1"

    # 2) Larger batch -> tiled grid path (tile_n=512 divides N -> no pad/slice; grid of 2).
    N_big = 1024
    x_big = jax.random.normal(kx2, (N_big, D_in), dtype=jnp.float32)
    out_big = jax.block_until_ready(two_layer_net(x_big, w1, b1, w2, b2))
    ref_big = _reference(x_big, w1, b1, w2, b2)
    assert out_big.shape == (N_big, D_out)
    assert jnp.allclose(out_big, ref_big, atol=1e-4, rtol=1e-4), "mismatch vs reference (big)"
    assert jnp.allclose(jnp.sum(out_big, axis=1), 1.0, atol=1e-5), "softmax rows must sum to ~1"

    print("KERNEL_OK")
</pallas_src>

<mosaic_0001>
module attributes {stable_mosaic.version = 11 : i64} {
  func.func @_two_layer_net_kernel(%arg0: memref<8x32xf32, #tpu.memory_space<vmem>>, %arg1: memref<32x64xf32, #tpu.memory_space<vmem>>, %arg2: memref<1x64xf32, #tpu.memory_space<vmem>>, %arg3: memref<64x16xf32, #tpu.memory_space<vmem>>, %arg4: memref<1x16xf32, #tpu.memory_space<vmem>>, %arg5: memref<8x16xf32, #tpu.memory_space<vmem>>) attributes {dimension_semantics = [], scalar_prefetch = 0 : i64, scratch_operands = 0 : i64, tpu.core_type = #tpu.core_type<tc>} {
    %c0 = arith.constant 0 : index
    %c0_0 = arith.constant 0 : index
    %0 = vector.load %arg0[%c0, %c0_0] : memref<8x32xf32, #tpu.memory_space<vmem>>, vector<8x32xf32>
    %c0_1 = arith.constant 0 : index
    %c0_2 = arith.constant 0 : index
    %1 = vector.load %arg1[%c0_1, %c0_2] : memref<32x64xf32, #tpu.memory_space<vmem>>, vector<32x64xf32>
    %cst = arith.constant dense<0.000000e+00> : vector<8x64xf32>
    %2 = tpu.matmul %0, %1, %cst {dimension_numbers = #tpu.dot_dimension_numbers<[1], [0], [0], [1], [0, 0, 1, 1], [], []>} : vector<8x32xf32>, vector<32x64xf32>, vector<8x64xf32> -> vector<8x64xf32>
    %c0_3 = arith.constant 0 : index
    %c0_4 = arith.constant 0 : index
    %3 = vector.load %arg2[%c0_3, %c0_4] : memref<1x64xf32, #tpu.memory_space<vmem>>, vector<1x64xf32>
    %4 = vector.broadcast %3 : vector<1x64xf32> to vector<8x64xf32>
    %5 = arith.addf %2, %4 : vector<8x64xf32>
    %cst_5 = arith.constant 0.000000e+00 : f32
    %6 = vector.broadcast %cst_5 : f32 to vector<8x64xf32>
    %7 = arith.maximumf %5, %6 : vector<8x64xf32>
    %c0_6 = arith.constant 0 : index
    %c0_7 = arith.constant 0 : index
    %8 = vector.load %arg3[%c0_6, %c0_7] : memref<64x16xf32, #tpu.memory_space<vmem>>, vector<64x16xf32>
    %cst_8 = arith.constant dense<0.000000e+00> : vector<8x16xf32>
    %9 = tpu.matmul %7, %8, %cst_8 {dimension_numbers = #tpu.dot_dimension_numbers<[1], [0], [0], [1], [0, 0, 1, 1], [], []>} : vector<8x64xf32>, vector<64x16xf32>, vector<8x16xf32> -> vector<8x16xf32>
    %c0_9 = arith.constant 0 : index
    %c0_10 = arith.constant 0 : index
    %10 = vector.load %arg4[%c0_9, %c0_10] : memref<1x16xf32, #tpu.memory_space<vmem>>, vector<1x16xf32>
    %11 = vector.broadcast %10 : vector<1x16xf32> to vector<8x16xf32>
    %12 = arith.addf %9, %11 : vector<8x16xf32>
    %cst_11 = arith.constant dense<0xFF800000> : vector<8xf32>
    %13 = vector.multi_reduction <maximumf>, %12, %cst_11 [1] : vector<8x16xf32> to vector<8xf32>
    %14 = vector.shape_cast %13 : vector<8xf32> to vector<8x1xf32>
    %15 = vector.broadcast %14 : vector<8x1xf32> to vector<8x16xf32>
    %16 = arith.subf %12, %15 : vector<8x16xf32>
    %17 = math.exp %16 : vector<8x16xf32>
    %cst_12 = arith.constant dense<0.000000e+00> : vector<8xf32>
    %18 = vector.multi_reduction <add>, %17, %cst_12 [1] : vector<8x16xf32> to vector<8xf32>
    %19 = vector.shape_cast %18 : vector<8xf32> to vector<8x1xf32>
    %20 = vector.broadcast %19 : vector<8x1xf32> to vector<8x16xf32>
    %21 = arith.divf %17, %20 : vector<8x16xf32>
    %c0_13 = arith.constant 0 : index
    %c0_14 = arith.constant 0 : index
    %22 = vector.load %arg5[%c0_13, %c0_14] : memref<8x16xf32, #tpu.memory_space<vmem>>, vector<8x16xf32>
    tpu.vector_store %arg5[%c0_13, %c0_14], %21 {strides = array<i32>} : memref<8x16xf32, #tpu.memory_space<vmem>>, vector<8x16xf32>,
    return
  }
}

</mosaic_0001>

<llo_original>
// kernel: two_layer_net.1
$region0: #{two_layer_net.1}
  #allocation0 [shape = 'u32[]', space=smem, size = 0x4, offset = 0x4, fixed_abs, tag = 'smem constant byte address 0x4 - core index']
  #allocation1 [shape = 'u32[144,128]{1,0:T(1,128)}', space=vmem, size = 0x12000, scoped, tag = 'internal scratch']
  %s0 = inlined_call_operand.vmem [shape: f32[8,32], index: 0, kind: input, shape index: {}]
  %s1 = inlined_call_operand.vmem [shape: f32[32,64], index: 1, kind: input, shape index: {}]
  %s2 = inlined_call_operand.vmem [shape: f32[1,64], index: 2, kind: input, shape index: {}]
  %s3 = inlined_call_operand.vmem [shape: f32[64,16], index: 3, kind: input, shape index: {}]
  %s4 = inlined_call_operand.vmem [shape: f32[1,16], index: 4, kind: input, shape index: {}]
  %s5 = inlined_call_operand.hbm [shape: f32[8,16], index: 5, kind: output, shape index: {}]
  %s6 = sld [smem:[#allocation0]]
  $region30: #{two_layer_net.1} parent=0
    _
  %s8 = ssub.s32 1, %s6
  %s9 = scalar_select 0, %s8, %s6
  $region1: #{two_layer_net.1} parent=0
    #allocation2 [shape = 'u8[4096]{0}', space=vmem, size = 0x1000, scoped, tag = 'output window, operand 0, single buffered']
    #allocation3 [shape = 's32[1]{0}', space=sflag, size = 0x4, scoped, tag = 'scoped memory for two_layer_net.1']
    %10 = vsyncpa [#allocation3], 0
    // Predicated region
    $region2: #{two_layer_net.1} parent=1 // pred_check
      _
    $region3: #{two_layer_net.1} parent=1 // pred_check_branch
      %12 = sbr.rel (0) target = $region5
    $region4: #{two_layer_net.1} parent=1 // pred_region
      _
    $region5: #{two_layer_net.1} parent=1 // pred_fallthru
      _
    // Predicated region
    $region6: #{two_layer_net.1} parent=1 // pred_check
      _
    $region7: #{two_layer_net.1} parent=1 // pred_check_branch
      %14 = sbr.rel (0) target = $region9
    $region8: #{two_layer_net.1} parent=1 // pred_region
      _
    $region9: #{two_layer_net.1} parent=1 // pred_fallthru
      _
    // Predicated region
    $region10: #{two_layer_net.1} parent=1 // pred_check
      _
    $region11: #{two_layer_net.1} parent=1 // pred_check_branch
      %16 = sbr.rel (0) target = $region13
    $region12: #{two_layer_net.1} parent=1 // pred_region
      _
    $region13: #{two_layer_net.1} parent=1 // pred_fallthru
      _
    // Predicated region
    $region14: #{two_layer_net.1} parent=1 // pred_check
      _
    $region15: #{two_layer_net.1} parent=1 // pred_check_branch
      %18 = sbr.rel (0) target = $region17
    $region16: #{two_layer_net.1} parent=1 // pred_region
      _
    $region17: #{two_layer_net.1} parent=1 // pred_fallthru
      _
    // Predicated region
    $region18: #{two_layer_net.1} parent=1 // pred_check
      _
    $region19: #{two_layer_net.1} parent=1 // pred_check_branch
      %20 = sbr.rel (0) target = $region21
    $region20: #{two_layer_net.1} parent=1 // pred_region
      _
    $region21: #{two_layer_net.1} parent=1 // pred_fallthru
      _
    %v21 = vld [vmem:[%s0] sm:$0xff]
    %v22 = vld [vmem:[%s1] sm:$0xff]
    %v23 = vld [vmem:[%s1 + $0x8] sm:$0xff]
    %v24 = vld [vmem:[%s1 + $0x10] sm:$0xff]
    %v25 = vld [vmem:[%s1 + $0x18] sm:$0xff]
    %v26 = vld [vmem:[%s2] sm:$0x1]
    %v28 = vlaneseq
    %v29 = vshrl.u32 %v28, 7
    %v30 = vsub.s32 0, %v29
    %v31 = vrot.slane %v26, %v30
    %vm33 = vcmask 261120
    %v35 = vsel %vm33, %v21, 0
    %37 = vmatprep.subr.mxu0 0.0
    %38 = vmatpush1.msra.mxu0 %v22
    %39 = vmatprep.subr.mxu0 0.0
    %40 = vmatpush1.msra.mxu0 %v23
    %41 = vmatprep.subr.mxu0 0.0
    %42 = vmatpush1.msra.mxu0 %v24
    %43 = vmatprep.subr.mxu0 0.0
    %44 = vmatpush1.msra.mxu0 %v25
    %45 = vmatprep.subr.mxu0 0.0
    %46 = vmatpush1.msra.mxu0 0.0
    %47 = vmatprep.subr.mxu0 0.0
    %48 = vmatpush1.msra.mxu0 0.0
    %49 = vmatprep.subr.mxu0 0.0
    %50 = vmatpush1.msra.mxu0 0.0
    %51 = vmatprep.subr.mxu0 0.0
    %52 = vmatpush1.msra.mxu0 0.0
    %53 = vmatprep.subr.mxu0 0.0
    %54 = vmatpush1.msra.mxu0 0.0
    %55 = vmatprep.subr.mxu0 0.0
    %56 = vmatpush1.msra.mxu0 0.0
    %57 = vmatprep.subr.mxu0 0.0
    %58 = vmatpush1.msra.mxu0 0.0
    %59 = vmatprep.subr.mxu0 0.0
    %60 = vmatpush1.msra.mxu0 0.0
    %61 = vmatprep.subr.mxu0 0.0
    %62 = vmatpush1.msra.mxu0 0.0
    %63 = vmatprep.subr.mxu0 0.0
    %64 = vmatpush1.msra.mxu0 0.0
    %65 = vmatprep.subr.mxu0 0.0
    %66 = vmatpush1.msra.mxu0 0.0
    %67 = vmatprep.subr.mxu0 0.0
    %68 = vmatpush1.msra.mxu0 0.0
    %69 = vmatprep.subr.mxu0 0.0
    %70 = vmatpush1.msra.mxu0 0.0
    %71 = vmatprep.subr.mxu0 0.0
    %72 = vmatpush1.msra.mxu0 0.0
    %73 = vmatprep.subr.mxu0 0.0
    %74 = vmatpush1.msra.mxu0 0.0
    %75 = vmatprep.subr.mxu0 0.0
    %76 = vmatpush1.msra.mxu0 0.0
    %77 = vmatprep.subr.mxu0 0.0
    %78 = vmatpush1.msra.mxu0 0.0
    %79 = vmatprep.subr.mxu0 0.0
    %80 = vmatpush1.msra.mxu0 0.0
    %81 = vmatprep.subr.mxu0 0.0
    %82 = vmatpush1.msra.mxu0 0.0
    %83 = vmatprep.subr.mxu0 0.0
    %84 = vmatpush1.msra.mxu0 0.0
    %85 = vmatprep.subr.mxu0 0.0
    %86 = vmatpush1.msra.mxu0 0.0
    %87 = vmatprep.subr.mxu0 0.0
    %88 = vmatpush1.msra.mxu0 0.0
    %89 = vmatprep.subr.mxu0 0.0
    %90 = vmatpush1.msra.mxu0 0.0
    %91 = vmatprep.subr.mxu0 0.0
    %92 = vmatpush1.msra.mxu0 0.0
    %93 = vmatprep.subr.mxu0 0.0
    %94 = vmatpush1.msra.mxu0 0.0
    %95 = vmatprep.subr.mxu0 0.0
    %96 = vmatpush1.msra.mxu0 0.0
    %97 = vmatprep.subr.mxu0 0.0
    %98 = vmatpush1.msra.mxu0 0.0
    %99 = vmatprep.subr.mxu0 0.0
    %100 = vmatpush1.msra.mxu0 0.0
    %101 = vmatprep.mubr.f32.mxu0 0.0
    %102 = vmatmul.mubr.f32.gmra.mrb[0].mxu0 %v35
    %v103 = vpop.f32.mrb[0].mxu0
    %v104 = vadd.f32 %v31, %v103
    %v105 = vpop.f32.mrb[0].mxu0
    %106 = vdwg.mxu0
    %v107 = vmax.f32 %v104, 0.0
    %v108 = vld [vmem:[%s3] sm:$0xff]
    %v109 = vld [vmem:[%s3 + $0x8] sm:$0xff]
    %v110 = vld [vmem:[%s3 + $0x10] sm:$0xff]
    %v111 = vld [vmem:[%s3 + $0x18] sm:$0xff]
    %v112 = vld [vmem:[%s3 + $0x20] sm:$0xff]
    %v113 = vld [vmem:[%s3 + $0x28] sm:$0xff]
    %v114 = vld [vmem:[%s3 + $0x30] sm:$0xff]
    %v115 = vld [vmem:[%s3 + $0x38] sm:$0xff]
    %v116 = vld [vmem:[%s4] sm:$0x1]
    %v118 = vlaneseq
    %v119 = vshrl.u32 %v118, 7
    %v120 = vsub.s32 0, %v119
    %v121 = vrot.slane %v116, %v120
    %vm123 = vcmask 523264
    %v125 = vsel %vm123, %v107, 0
    %127 = vmatprep.subr.mxu0 0.0
    %128 = vmatpush1.msra.mxu0 %v108
    %129 = vmatprep.subr.mxu0 0.0
    %130 = vmatpush1.msra.mxu0 %v109
    %131 = vmatprep.subr.mxu0 0.0
    %132 = vmatpush1.msra.mxu0 %v110
    %133 = vmatprep.subr.mxu0 0.0
    %134 = vmatpush1.msra.mxu0 %v111
    %135 = vmatprep.subr.mxu0 0.0
    %136 = vmatpush1.msra.mxu0 %v112
    %137 = vmatprep.subr.mxu0 0.0
    %138 = vmatpush1.msra.mxu0 %v113
    %139 = vmatprep.subr.mxu0 0.0
    %140 = vmatpush1.msra.mxu0 %v114
    %141 = vmatprep.subr.mxu0 0.0
    %142 = vmatpush1.msra.mxu0 %v115
    %143 = vmatprep.subr.mxu0 0.0
    %144 = vmatpush1.msra.mxu0 0.0
    %145 = vmatprep.subr.mxu0 0.0
    %146 = vmatpush1.msra.mxu0 0.0
    %147 = vmatprep.subr.mxu0 0.0
    %148 = vmatpush1.msra.mxu0 0.0
    %149 = vmatprep.subr.mxu0 0.0
    %150 = vmatpush1.msra.mxu0 0.0
    %151 = vmatprep.subr.mxu0 0.0
    %152 = vmatpush1.msra.mxu0 0.0
    %153 = vmatprep.subr.mxu0 0.0
    %154 = vmatpush1.msra.mxu0 0.0
    %155 = vmatprep.subr.mxu0 0.0
    %156 = vmatpush1.msra.mxu0 0.0
    %157 = vmatprep.subr.mxu0 0.0
    %158 = vmatpush1.msra.mxu0 0.0
    %159 = vmatprep.subr.mxu0 0.0
    %160 = vmatpush1.msra.mxu0 0.0
    %161 = vmatprep.subr.mxu0 0.0
    %162 = vmatpush1.msra.mxu0 0.0
    %163 = vmatprep.subr.mxu0 0.0
    %164 = vmatpush1.msra.mxu0 0.0
    %165 = vmatprep.subr.mxu0 0.0
    %166 = vmatpush1.msra.mxu0 0.0
    %167 = vmatprep.subr.mxu0 0.0
    %168 = vmatpush1.msra.mxu0 0.0
    %169 = vmatprep.subr.mxu0 0.0
    %170 = vmatpush1.msra.mxu0 0.0
    %171 = vmatprep.subr.mxu0 0.0
    %172 = vmatpush1.msra.mxu0 0.0
    %173 = vmatprep.subr.mxu0 0.0
    %174 = vmatpush1.msra.mxu0 0.0
    %175 = vmatprep.subr.mxu0 0.0
    %176 = vmatpush1.msra.mxu0 0.0
    %177 = vmatprep.subr.mxu0 0.0
    %178 = vmatpush1.msra.mxu0 0.0
    %179 = vmatprep.subr.mxu0 0.0
    %180 = vmatpush1.msra.mxu0 0.0
    %181 = vmatprep.subr.mxu0 0.0
    %182 = vmatpush1.msra.mxu0 0.0
    %183 = vmatprep.subr.mxu0 0.0
    %184 = vmatpush1.msra.mxu0 0.0
    %185 = vmatprep.subr.mxu0 0.0
    %186 = vmatpush1.msra.mxu0 0.0
    %187 = vmatprep.subr.mxu0 0.0
    %188 = vmatpush1.msra.mxu0 0.0
    %189 = vmatprep.subr.mxu0 0.0
    %190 = vmatpush1.msra.mxu0 0.0
    %191 = vmatprep.mubr.f32.mxu0 0.0
    %192 = vmatmul.mubr.f32.gmra.mrb[0].mxu0 %v125
    %v193 = vpop.f32.mrb[0].mxu0
    %v194 = vadd.f32 %v121, %v193
    %v195 = vpop.f32.mrb[0].mxu0
    %196 = vdwg.mxu0
    %vm197 = vcmask 130048
    %v198 = vsel %vm197, %v194, -inf
    %199 = vmax.xlane.f32.xlu0 %v198
    %v200 = vpop.xlane.xlu0 %199
    %v201 = vsub.f32 %v194, %v200
    %v202 = vmul.f32 %v201, 1.442695
    %v203 = vpow.pop %v202
    %v204 = vsel %vm197, %v203, 0.0
    %205 = vadd.xlane.f32.xlu0 %v204
    %v206 = vpop.xlane.xlu0 %205
    %v207 = vrcp.pop %v206
    %v208 = vmul.f32 %v203, %v207
    %209 = vst.msk [vmem:[#allocation2] sm:$0xff] %vm197, %v208
    // Predicated region
    $region22: #{two_layer_net.1} parent=1 // pred_check
      _
    $region23: #{two_layer_net.1} parent=1 // pred_check_branch
      %211 = sbr.rel (0) target = $region25
    $region24: #{two_layer_net.1} parent=1 // pred_region
      %s213 = ssub.s32 128, 128
      %214 = vsyncadd [#allocation3], %s213
      %s216 = sshll.u32 [#allocation2], 4
      %s217 = int_to_ptr.vmem [resolvable:$true] %s216
      %219 = dma.vmem_to_hbm [thread:$0]  %s217, 128, %s5, [#allocation3]
    $region25: #{two_layer_net.1} parent=1 // pred_fallthru
      _
    // Predicated region
    $region26: #{two_layer_net.1} parent=1 // pred_check
      _
    $region27: #{two_layer_net.1} parent=1 // pred_check_branch
      %221 = sbr.rel (0) target = $region29
    $region28: #{two_layer_net.1} parent=1 // pred_region
      %222 = dma.done [#allocation3], 128
    $region29: #{two_layer_net.1} parent=1 // pred_fallthru
      _
    %223 = vsyncpa [#allocation3], 1

</llo_original>
